<compile_context>
chip_gen: v7x
topology: tpu7x:2x2x1
jax: 0.10.0
libtpu: 0.0.40
codegen_flags: <defaults>
</compile_context>

<pallas_src>
import functools

import jax
import jax.numpy as jnp
from jax.experimental import pallas as pl
from jax.experimental.pallas import tpu as pltpu

_EPS = 1e-6


def _tv_kernel(x_ref, o_ref, acc_ref, prev_ref, *, tile_h, h_total, num_tiles,
               inv_numel):
    """Per-(channel, row-tile) total-variation partial sums.

    x_ref   : (tile_h, W) native-dtype VMEM block (one channel, one row tile).
    o_ref   : (1, 1) f32 VMEM block; same block for every row tile of a channel.
    acc_ref : (1,) f32 SMEM scratch  -- running per-channel sum.
    prev_ref: (1, W) f32 VMEM scratch -- last row of the previous row tile.
    """
    if num_tiles == 1:
        # Single-tile fast path: whole channel resident, no masks, no halo.
        x = x_ref[...].astype(jnp.float32)
        dx = jnp.abs(x[:, 1:] - x[:, :-1] + _EPS)
        dy = jnp.abs(x[1:, :] - x[:-1, :] + _EPS)
        total = (jnp.sum(dx) + jnp.sum(dy)) * jnp.float32(inv_numel)
        o_ref[...] = jnp.full((1, 1), total, dtype=jnp.float32)
        return

    t = pl.program_id(1)

    @pl.when(t == 0)
    def _init():
        acc_ref[0] = jnp.float32(0.0)

    x = x_ref[...].astype(jnp.float32)                      # (tile_h, W)

    # Number of valid (in-bounds) rows in this tile.  Only the last tile can
    # be partial (its out-of-bounds rows hold unspecified data -> masked).
    valid = jnp.minimum(tile_h, h_total - t * tile_h)       # scalar int32

    row = jax.lax.broadcasted_iota(jnp.int32, (tile_h, 1), 0)
    row_ok = row < valid                                     # (tile_h, 1)

    # Horizontal diffs (within a row): valid for every in-bounds row.
    dx = jnp.where(row_ok, jnp.abs(x[:, 1:] - x[:, :-1] + _EPS), 0.0)

    # Vertical diffs inside the tile: pair (i, i+1) valid iff i + 1 < valid.
    dy = jnp.where(row[: tile_h - 1] + 1 < valid,
                   jnp.abs(x[1:, :] - x[:-1, :] + _EPS), 0.0)

    partial = jnp.sum(dx) + jnp.sum(dy)

    # Vertical diff across the tile boundary: first row of this tile against
    # the last row of the previous one (carried in VMEM scratch).
    @pl.when(t > 0)
    def _halo():
        acc_ref[0] += jnp.sum(jnp.abs(x[0:1, :] - prev_ref[...] + _EPS))

    acc_ref[0] += partial

    # Stash this tile's last row for the next tile.  Non-final tiles are
    # always full, so the last-row index is static.
    @pl.when(t + 1 < num_tiles)
    def _stash():
        prev_ref[...] = x[tile_h - 1: tile_h, :]

    @pl.when(t + 1 == num_tiles)
    def _finalize():
        o_ref[...] = jnp.full((1, 1), acc_ref[0] * jnp.float32(inv_numel),
                              dtype=jnp.float32)


def total_variation(adv_patch: jax.Array, *, max_tile_rows: int = 256) -> jax.Array:
    """Total variation of a (C, H, W) patch -> scalar float32."""
    C, H, W = adv_patch.shape

    # Row-tile size: whole channel if it is small enough, otherwise a multiple
    # of 8 so the sublane tiling constraint holds for every non-final tile.
    max_tile_rows = max(8, (max_tile_rows // 8) * 8)
    if H <= max_tile_rows:
        tile_h, num_tiles = H, 1
    else:
        tile_h = max_tile_rows
        num_tiles = pl.cdiv(H, tile_h)

    kernel = functools.partial(
        _tv_kernel,
        tile_h=tile_h,
        h_total=H,
        num_tiles=num_tiles,
        inv_numel=1.0 / float(C * H * W),
    )

    grid_spec = pltpu.PrefetchScalarGridSpec(
        num_scalar_prefetch=0,
        grid=(C, num_tiles),
        in_specs=[pl.BlockSpec((None, tile_h, W), lambda c, t: (c, t, 0))],
        out_specs=pl.BlockSpec((None, 1, 1), lambda c, t: (c, 0, 0)),
        scratch_shapes=[
            pltpu.SMEM((1,), jnp.float32),     # per-channel running sum
            pltpu.VMEM((1, W), jnp.float32),   # halo: last row of previous tile
        ],
    )

    itemsize = jnp.dtype(adv_patch.dtype).itemsize
    cost = pl.CostEstimate(
        flops=6 * C * H * W,
        transcendentals=0,
        bytes_accessed=C * H * W * itemsize + C * 4,
    )

    out = pl.pallas_call(
        kernel,
        out_shape=jax.ShapeDtypeStruct((C, 1, 1), jnp.float32),
        grid_spec=grid_spec,
        compiler_params=pltpu.CompilerParams(
            dimension_semantics=("parallel", "arbitrary")),
        cost_estimate=cost,
    )(adv_patch)

    # Tiny (C,)-sized reduction in the wrapper so the channel axis can run in
    # parallel across TensorCores on v7x.
    return jnp.sum(out)


def _total_variation_ref(adv_patch: jax.Array) -> jax.Array:
    """Pure-JAX reference mirroring the PyTorch forward."""
    x = adv_patch.astype(jnp.float32)
    tv1 = jnp.sum(jnp.abs(x[:, :, 1:] - x[:, :, :-1] + 1e-6))
    tv2 = jnp.sum(jnp.abs(x[:, 1:, :] - x[:, :-1, :] + 1e-6))
    return (tv1 + tv2) / x.size


if __name__ == "__main__":
    key = jax.random.PRNGKey(0)

    # Small RGB adversarial patch (C, H, W): single-tile fast path.
    adv_patch = jax.random.uniform(key, (3, 16, 16), dtype=jnp.float32)
    tv = total_variation(adv_patch)
    jax.block_until_ready(tv)
    ref = _total_variation_ref(adv_patch)
    assert jnp.allclose(tv, ref, rtol=1e-5, atol=1e-6), (tv, ref)

    # Unaligned (H, W): full-extent blocks, no padding anywhere.
    adv_patch2 = jax.random.uniform(
        jax.random.PRNGKey(1), (3, 37, 53), dtype=jnp.float32
    )
    tv2 = total_variation(adv_patch2)
    jax.block_until_ready(tv2)
    ref2 = _total_variation_ref(adv_patch2)
    assert jnp.allclose(tv2, ref2, rtol=1e-4, atol=1e-5), (tv2, ref2)

    # Force the tiled path (row tiles + halo row + partial last tile) and the
    # native-dtype (bf16) DMA with in-kernel upcast.
    adv_patch3 = jax.random.uniform(
        jax.random.PRNGKey(2), (3, 77, 64), dtype=jnp.float32
    ).astype(jnp.bfloat16)
    tv3 = total_variation(adv_patch3, max_tile_rows=32)
    jax.block_until_ready(tv3)
    ref3 = _total_variation_ref(adv_patch3)
    assert jnp.allclose(tv3, ref3, rtol=1e-3, atol=1e-4), (tv3, ref3)

    print("KERNEL_OK")
</pallas_src>

<mosaic_0001>
module attributes {stable_mosaic.version = 11 : i64} {
  func.func @_tv_kernel(%arg0: i32, %arg1: i32, %arg2: memref<1x16x16xf32, #tpu.memory_space<vmem>>, %arg3: memref<1x1x1xf32, #tpu.memory_space<vmem>>, %arg4: memref<1xf32, #tpu.memory_space<smem>>, %arg5: memref<1x16xf32, #tpu.memory_space<vmem>>) attributes {dimension_semantics = [#tpu.dimension_semantics<parallel>, #tpu.dimension_semantics<arbitrary>], iteration_bounds = array<i64: 3, 1>, scalar_prefetch = 0 : i64, scratch_operands = 2 : i64, tpu.core_type = #tpu.core_type<tc>, window_params = [{transform_indices = @transform_0, window_bounds = array<i64: 1, 16, 16>}, {transform_indices = @transform_1, window_bounds = array<i64: 1, 1, 1>}]} {
    %c0 = arith.constant 0 : index
    %c0_0 = arith.constant 0 : index
    %c0_1 = arith.constant 0 : index
    %0 = vector.load %arg2[%c0, %c0_0, %c0_1] : memref<1x16x16xf32, #tpu.memory_space<vmem>>, vector<1x16x16xf32>
    %1 = vector.shape_cast %0 : vector<1x16x16xf32> to vector<16x16xf32>
    %2 = vector.extract_strided_slice %1 {offsets = [0, 1], sizes = [16, 15], strides = [1, 1]} : vector<16x16xf32> to vector<16x15xf32>
    %3 = vector.extract_strided_slice %1 {offsets = [0, 0], sizes = [16, 15], strides = [1, 1]} : vector<16x16xf32> to vector<16x15xf32>
    %4 = arith.subf %2, %3 : vector<16x15xf32>
    %cst = arith.constant 9.99999997E-7 : f32
    %5 = vector.broadcast %cst : f32 to vector<16x15xf32>
    %6 = arith.addf %4, %5 : vector<16x15xf32>
    %7 = math.absf %6 : vector<16x15xf32>
    %8 = vector.extract_strided_slice %1 {offsets = [1, 0], sizes = [15, 16], strides = [1, 1]} : vector<16x16xf32> to vector<15x16xf32>
    %9 = vector.extract_strided_slice %1 {offsets = [0, 0], sizes = [15, 16], strides = [1, 1]} : vector<16x16xf32> to vector<15x16xf32>
    %10 = arith.subf %8, %9 : vector<15x16xf32>
    %cst_2 = arith.constant 9.99999997E-7 : f32
    %11 = vector.broadcast %cst_2 : f32 to vector<15x16xf32>
    %12 = arith.addf %10, %11 : vector<15x16xf32>
    %13 = math.absf %12 : vector<15x16xf32>
    %14 = vector.shape_cast %7 : vector<16x15xf32> to vector<1x16x15xf32>
    %cst_3 = arith.constant dense<0.000000e+00> : vector<1xf32>
    %15 = vector.multi_reduction <add>, %14, %cst_3 [1, 2] : vector<1x16x15xf32> to vector<1xf32>
    %16 = vector.shape_cast %15 : vector<1xf32> to vector<1x1x1xf32>
    %17 = vector.extract %16[0, 0, 0] : f32 from vector<1x1x1xf32>
    %18 = vector.shape_cast %13 : vector<15x16xf32> to vector<1x15x16xf32>
    %cst_4 = arith.constant dense<0.000000e+00> : vector<1xf32>
    %19 = vector.multi_reduction <add>, %18, %cst_4 [1, 2] : vector<1x15x16xf32> to vector<1xf32>
    %20 = vector.shape_cast %19 : vector<1xf32> to vector<1x1x1xf32>
    %21 = vector.extract %20[0, 0, 0] : f32 from vector<1x1x1xf32>
    %22 = arith.addf %17, %21 : f32
    %cst_5 = arith.constant 0.00130208337 : f32
    %23 = arith.mulf %22, %cst_5 : f32
    %24 = vector.broadcast %23 : f32 to vector<1x1xf32>
    %c0_6 = arith.constant 0 : index
    %c0_7 = arith.constant 0 : index
    %c0_8 = arith.constant 0 : index
    %25 = vector.load %arg3[%c0_6, %c0_7, %c0_8] : memref<1x1x1xf32, #tpu.memory_space<vmem>>, vector<1x1x1xf32>
    %26 = vector.shape_cast %25 : vector<1x1x1xf32> to vector<1x1xf32>
    %27 = vector.shape_cast %24 : vector<1x1xf32> to vector<1x1x1xf32>
    tpu.vector_store %arg3[%c0_6, %c0_7, %c0_8], %27 {strides = array<i32>} : memref<1x1x1xf32, #tpu.memory_space<vmem>>, vector<1x1x1xf32>,
    return
  }
  func.func @transform_0(%arg0: i32, %arg1: i32) -> (i32, i32, i32) {
    %c0_i32 = arith.constant 0 : i32
    %c0_i32_0 = arith.constant 0 : i32
    return %arg0, %arg1, %c0_i32 : i32, i32, i32
  }
  func.func @transform_1(%arg0: i32, %arg1: i32) -> (i32, i32, i32) {
    %c0_i32 = arith.constant 0 : i32
    %c0_i32_0 = arith.constant 0 : i32
    %c0_i32_1 = arith.constant 0 : i32
    return %arg0, %c0_i32, %c0_i32_0 : i32, i32, i32
  }
}

</mosaic_0001>

<llo_original>
// kernel: tpu_custom_call.1
$region0: #{tpu_custom_call.1}
  #allocation0 [shape = 'u32[]', space=smem, size = 0x4, offset = 0x4, fixed_abs, tag = 'smem constant byte address 0x4 - core index']
  #allocation1 [shape = 'u32[144,128]{1,0:T(1,128)}', space=vmem, size = 0x12000, scoped, tag = 'internal scratch']
  #allocation2 [shape = 'f32[1]{0:T(128)}', space=smem, size = 0x200, scoped, tag = 'scratch operand']
  #allocation3 [shape = 'f32[1,16]{1,0:T(1,128)}', space=vmem, size = 0x200, scoped, tag = 'scratch operand']
  %s0 = inlined_call_operand.hbm [shape: f32[3,16,16], index: 0, kind: input, shape index: {}]
  %s1 = inlined_call_operand.vmem [shape: f32[3,1,1], index: 1, kind: output, shape index: {}]
  %s2 = sld [smem:[#allocation0]]
  $region41: #{tpu_custom_call.1} parent=0
    _
  %s4 = ssub.s32 1, %s2
  %s5 = scalar_select 0, %s4, %s2
  $region1: #{tpu_custom_call.1} parent=0
    #allocation4 [shape = 'u8[16384]{0}', space=vmem, size = 0x4000, scoped, tag = 'input window, operand 0']
    #allocation5 [shape = 's32[2]{0}', space=sflag, size = 0x8, scoped, tag = 'scoped memory for tpu_custom_call.1']
    %6 = vsyncpa [#allocation5], 0
    %s7 = scalar_lea.sflag [#allocation5], 1
    %8 = vsyncpa %s7, 0
    loop: start=0, step=1, limit=5
    $region2: #{tpu_custom_call.1} parent=1 // loop_pre_header
      _
    $region3: #{tpu_custom_call.1} parent=1 // loop_header
      %s10 = sphi 0, %s14
      %p11 = scmp.ge.s32.totalorder %s10, 5
      %s17 = sphi 0, %s29
      %s18 = sphi 0, %s25
      %s19 = sphi 0, %s17
      %s20 = sphi 0, %s18
      %s21 = sphi 0, %s19
      %s22 = sphi 0, %s20
      %s34 = sphi 0, %s36
      %s37 = sphi 0, %s34
      %s38 = sphi 0, %s37
      %s54 = sphi 0, %s38
      %s60 = sphi 0, %s62
      %s63 = sphi 0, %s60
      %s64 = sphi 0, %s63
      %s80 = sphi 0, %s64
    $region4: #{tpu_custom_call.1} parent=1 // loop_header_branch
      %13 = sbr.rel (%p11) target = $region8
    $region5: #{tpu_custom_call.1} parent=1 // loop_body
      %s15 = ssub.s32 %s10, 1
      %s16 = ssub.s32 %s10, 2
      %s23 = sadd.s32 1, %s18
      %p24 = scmp.ge.s32.totalorder %s23, 1
      %s25 = scalar_select %p24, 0, %s23
      %s26 = sadd.s32 1, %s17
      %s27 = scalar_select %p24, %s26, %s17
      %p28 = scmp.ge.s32.totalorder %s27, 3
      %s29 = scalar_select %p28, 0, %s27
      %s30 = ssub.s32 %s17, %s29
      %s31 = ssub.s32 %s18, %s25
      %s32 = sor.u32 %s30, %s31
      %p33 = scmp.eq.s32.totalorder %s32, 0
      %s35 = sadd.s32 %s34, 1
      %s36 = scalar_select %p33, %s34, %s35
      %p39 = pneg %p33
      %p40 = scmp.eq.s32.totalorder %s10, 2
      %p41 = por %p39, %p40
      %p42 = scmp.ne.s32.totalorder %s34, %s37
      %p43 = scmp.eq.s32.totalorder %s10, 0
      %p44 = por %p42, %p43
      %p45 = scmp.ne.s32.totalorder %s34, %s37
      %p46 = scmp.eq.s32.totalorder %s15, 2
      %p47 = por %p45, %p46
      %p48 = scmp.ne.s32.totalorder %s37, %s38
      %p49 = scmp.eq.s32.totalorder %s15, 0
      %p50 = por %p48, %p49
      %p51 = scmp.ne.s32.totalorder %s37, %s38
      %p52 = scmp.eq.s32.totalorder %s16, 2
      %p53 = por %p51, %p52
      %p55 = scmp.ne.s32.totalorder %s38, %s54
      %p56 = scmp.eq.s32.totalorder %s16, 0
      %p57 = por %p55, %p56
      %s58 = ssub.s32 %s17, %s29
      %p59 = scmp.eq.s32.totalorder %s58, 0
      %s61 = sadd.s32 %s60, 1
      %s62 = scalar_select %p59, %s60, %s61
      %p65 = pneg %p59
      %p66 = scmp.eq.s32.totalorder %s10, 2
      %p67 = por %p65, %p66
      %p68 = scmp.ne.s32.totalorder %s60, %s63
      %p69 = scmp.eq.s32.totalorder %s10, 0
      %p70 = por %p68, %p69
      %p71 = scmp.ne.s32.totalorder %s60, %s63
      %p72 = scmp.eq.s32.totalorder %s15, 2
      %p73 = por %p71, %p72
      %p74 = scmp.ne.s32.totalorder %s63, %s64
      %p75 = scmp.eq.s32.totalorder %s15, 0
      %p76 = por %p74, %p75
      %p77 = scmp.ne.s32.totalorder %s63, %s64
      %p78 = scmp.eq.s32.totalorder %s16, 2
      %p79 = por %p77, %p78
      %p81 = scmp.ne.s32.totalorder %s64, %s80
      %p82 = scmp.eq.s32.totalorder %s16, 0
      %p83 = por %p81, %p82
      %p84 = scmp.le.s32.totalorder 1, %s10
      %p85 = scmp.lt.s32.totalorder %s10, 4
      %p86 = pnand %p84, %p85
      %p87 = pneg %p86
      // Predicated region
      $region9: #{tpu_custom_call.1} parent=5 // pred_check
        _
      $region10: #{tpu_custom_call.1} parent=5 // pred_check_branch
        %89 = sbr.rel (%p86) target = $region12
      $region11: #{tpu_custom_call.1} parent=5 // pred_region
        %s90 = ssub.s32 %s10, 1
      $region12: #{tpu_custom_call.1} parent=5 // pred_fallthru
        _
      %p91 = scmp.lt.s32.totalorder %s10, 3
      // Predicated region
      $region13: #{tpu_custom_call.1} parent=5 // pred_check
        %p92 = pneg %p91
      $region14: #{tpu_custom_call.1} parent=5 // pred_check_branch
        %94 = sbr.rel (%p92) target = $region16
      $region15: #{tpu_custom_call.1} parent=5 // pred_region
        // Predicated region
        $region17: #{tpu_custom_call.1} parent=15 // pred_check
          %p95 = pneg %p44
        $region18: #{tpu_custom_call.1} parent=15 // pred_check_branch
          %97 = sbr.rel (%p95) target = $region20
        $region19: #{tpu_custom_call.1} parent=15 // pred_region
          %s98 = sand.u32 %s34, 1
          %s99 = scalar_lea.sflag [#allocation5], %s98
          %s100 = sand.u32 %s34, 1
          %s101 = smul.addr %s100, 16
          %s102 = scalar_lea.vmem [#allocation4], %s101
          %s103 = smul.u32 2, %s18
          %s105 = ssub.s32 256, 256
          %106 = vsyncadd %s99, %s105
          %s107 = smul.addr %s17, 2
          %s108 = sadd.s32 %s103, %s107
          %s109 = smul.addr %s108, 128
          %s110 = scalar_lea.hbm %s0, %s109
          %s111 = sshll.u32 %s102, 4
          %s112 = int_to_ptr.vmem [resolvable:$true] %s111
          %117 = dma.hbm_to_vmem [thread:$0]  %s110, 256, %s112, %s99, 128, 128, 8
        $region20: #{tpu_custom_call.1} parent=15 // pred_fallthru
          _
      $region16: #{tpu_custom_call.1} parent=5 // pred_fallthru
        _
      %p118 = scmp.le.s32.totalorder 1, %s10
      %p119 = scmp.lt.s32.totalorder %s10, 4
      %p120 = pnand %p118, %p119
      %p121 = pneg %p120
      // Predicated region
      $region21: #{tpu_custom_call.1} parent=5 // pred_check
        _
      $region22: #{tpu_custom_call.1} parent=5 // pred_check_branch
        %123 = sbr.rel (%p120) target = $region24
      $region23: #{tpu_custom_call.1} parent=5 // pred_region
        %s124 = ssub.s32 %s10, 1
        %s125 = sand.u32 %s37, 1
        %s126 = scalar_lea.sflag [#allocation5], %s125
        %s127 = sand.u32 %s37, 1
        %s128 = smul.addr %s127, 16
        %s129 = scalar_lea.vmem [#allocation4], %s128
        // Predicated region
        $region25: #{tpu_custom_call.1} parent=23 // pred_check
          %p130 = pneg %p50
        $region26: #{tpu_custom_call.1} parent=23 // pred_check_branch
          %132 = sbr.rel (%p130) target = $region28
        $region27: #{tpu_custom_call.1} parent=23 // pred_region
          %133 = dma.done %s126, 256
        $region28: #{tpu_custom_call.1} parent=23 // pred_fallthru
          _
        %s134 = sand.u32 %s37, 1
        %s135 = scalar_lea.sflag [#allocation5], %s134
        %s136 = sand.u32 %s37, 1
        %s137 = smul.addr %s136, 16
        %s138 = scalar_lea.vmem [#allocation4], %s137
        %p139 = pneg %p50
        %p140 = pneg %p47
        %p141 = pneg %p76
        %p142 = pneg %p73
        %p143 = scmp.lt.s32.totalorder %s19, 2
        %s144 = scalar_select %p143, %s19, 2
        %s145 = scalar_lea.vmem %s1, %s144
        %s146 = smul.u32 2, %s20
        %p147 = scmp.lt.s32.totalorder %s19, 2
        %s148 = scalar_select %p147, %s19, 2
        %s149 = scalar_lea.vmem %s1, %s148
        %v150 = vld [vmem:[%s129] sm:$0xff]
        %v151 = vld [vmem:[%s129 + $0x8] sm:$0xff]
        %154 = vrot.lane.b32.xlu0 %v150, 1
        %v155 = vpop.permute.xlu0 %154
        %156 = vrot.lane.b32.xlu0 %v151, 1
        %v157 = vpop.permute.xlu0 %156
        %v160 = vsub.f32 %v150, %v155
        %v161 = vsub.f32 %v151, %v157
        %v162 = vadd.f32 %v160, 1e-06
        %v163 = vadd.f32 %v161, 1e-06
        %v164 = vand.u32 2147483647, %v162
        %v165 = vand.u32 2147483647, %v163
        %vm166 = vcmask 1040384
        %v167 = vrot.slane %v150, 7
        %v168 = vrot.slane %v151, 7
        %v169 = vsel %vm166, %v167, %v168
        %v172 = vsub.f32 %v150, %v167
        %v173 = vsub.f32 %v151, %v169
        %v174 = vadd.f32 %v172, 1e-06
        %v175 = vadd.f32 %v173, 1e-06
        %v176 = vand.u32 2147483647, %v174
        %v177 = vand.u32 2147483647, %v175
        %180 = vrot.lane.b32.xlu0 %v164, 127
        %v181 = vpop.permute.xlu0 %180
        %182 = vrot.lane.b32.xlu0 %v165, 127
        %v183 = vpop.permute.xlu0 %182
        %vm186 = vcmask 121856
        %v187 = vsel %vm186, %v181, 0.0
        %v188 = vsel %vm186, %v183, 0.0
        %v189 = vadd.f32 %v187, %v188
        %190 = vadd.xlane.f32.xlu0 %v189
        %v191 = vpop.xlane.xlu0 %190
        %v192 = vrot.slane %v191, 4
        %v193 = vadd.f32 %v191, %v192
        %v194 = vrot.slane %v193, 2
        %v195 = vadd.f32 %v193, %v194
        %v196 = vrot.slane %v195, 1
        %v197 = vadd.f32 %v195, %v196
        %s198 = vtos %v197
        %vm201 = vcmask 1046528
        %v202 = vrot.slane %v176, 1
        %v203 = vrot.slane %v177, 1
        %v204 = vsel %vm201, %v202, %v203
        %vm207 = vcmask 130048
        %v208 = vsel %vm207, %v204, 0.0
        %vm209 = vcmask 129024
        %v210 = vsel %vm209, %v203, 0.0
        %v211 = vadd.f32 %v208, %v210
        %212 = vadd.xlane.f32.xlu0 %v211
        %v213 = vpop.xlane.xlu0 %212
        %v214 = vrot.slane %v213, 4
        %v215 = vadd.f32 %v213, %v214
        %v216 = vrot.slane %v215, 2
        %v217 = vadd.f32 %v215, %v216
        %v218 = vrot.slane %v217, 1
        %v219 = vadd.f32 %v217, %v218
        %s220 = vtos %v219
        %s221 = sadd.f32 %s198, %s220
        %s222 = smul.f32 %s221, 0.0013020834
        %v223 = vstv %s222
        %vm224 = vcmask 0
        %225 = vst.msk [vmem:[%s149] sm:$0x1] %vm224, %v223
        %p226 = scmp.lt.s32.totalorder %s19, 2
        %s227 = scalar_select %p226, %s19, 2
        %s228 = scalar_lea.vmem %s1, %s227
        // Predicated region
        $region29: #{tpu_custom_call.1} parent=23 // pred_check
          %p229 = pneg %p73
        $region30: #{tpu_custom_call.1} parent=23 // pred_check_branch
          %231 = sbr.rel (%p229) target = $region32
        $region31: #{tpu_custom_call.1} parent=23 // pred_region
          _
        $region32: #{tpu_custom_call.1} parent=23 // pred_fallthru
          _
      $region24: #{tpu_custom_call.1} parent=5 // pred_fallthru
        _
      %p232 = scmp.le.s32.totalorder 2, %s10
      // Predicated region
      $region33: #{tpu_custom_call.1} parent=5 // pred_check
        %p233 = pneg %p232
      $region34: #{tpu_custom_call.1} parent=5 // pred_check_branch
        %235 = sbr.rel (%p233) target = $region36
      $region35: #{tpu_custom_call.1} parent=5 // pred_region
        %s236 = ssub.s32 %s10, 2
        // Predicated region
        $region37: #{tpu_custom_call.1} parent=35 // pred_check
          %p237 = pneg %p79
        $region38: #{tpu_custom_call.1} parent=35 // pred_check_branch
          %239 = sbr.rel (%p237) target = $region40
        $region39: #{tpu_custom_call.1} parent=35 // pred_region
          %p240 = scmp.lt.s32.totalorder %s21, 2
          %s241 = scalar_select %p240, %s21, 2
          %s242 = scalar_lea.vmem %s1, %s241
        $region40: #{tpu_custom_call.1} parent=35 // pred_fallthru
          _
      $region36: #{tpu_custom_call.1} parent=5 // pred_fallthru
        _
    $region6: #{tpu_custom_call.1} parent=1 // loop_footer
      %s14 = sadd.s32 1, %s10
    $region7: #{tpu_custom_call.1} parent=1 // loop_footer_branch
      %9 = sbr.rel target = $region3
    $region8: #{tpu_custom_call.1} parent=1 // loop_exit
      _
    %243 = vsyncpa [#allocation5], 1
    %s244 = scalar_lea.sflag [#allocation5], 1
    %245 = vsyncpa %s244, 1

</llo_original>
